<compile_context>
chip_gen: v6e
topology: v6e:2x2x1
jax: 0.10.0
libtpu: 0.0.40
codegen_flags: <defaults>
</compile_context>

<pallas_src>
import functools

import jax
import jax.numpy as jnp
import numpy as np
from jax.experimental import pallas as pl
from jax.experimental.pallas import tpu as pltpu


def _round_up(x, m):
    return (x + m - 1) // m * m


# --------------------------------------------------------------------------- kernel
def drill_kernel(x_ref, wc_ref, bc_ref, w1_ref, b1_ref, w2_ref, b2_ref, out_ref):
    # conv1 (3-tap, H=1) as ONE block-diagonal MXU matmul; bias + ReLU fused epilogue.
    # Output layout is already the flattened (w, c_out) activation -> no in-kernel reshape.
    conv = jnp.dot(x_ref[...], wc_ref[...], preferred_element_type=jnp.float32)
    conv = jnp.maximum(conv + bc_ref[...], 0.0)                  # (TB, D*C_out)

    # fc1 + ReLU
    h = jnp.dot(conv, w1_ref[...], preferred_element_type=jnp.float32)
    h = jnp.maximum(h + b1_ref[...], 0.0)                        # (TB, F2)

    # fc2 (columns lane-padded to a multiple of 128 -> dense store; sliced outside)
    out_ref[...] = (jnp.dot(h, w2_ref[...], preferred_element_type=jnp.float32)
                    + b2_ref[...]).astype(out_ref.dtype)         # (TB, Np)


# --------------------------------------------------------------- one-time param repack
def prepare_params(params):
    """Repack the PyTorch-shaped parameters for the kernel.  Run ONCE (not per call)."""
    wconv, bconv, w1, b1, w2, b2 = params
    C_out, C_in, KH, KW = wconv.shape
    assert KH == 3 and KW == 3, "Drill uses kernel_size=3 with padding=1"
    F2, F = w1.shape
    D = F // C_out
    num_out = w2.shape[0]
    K_in = KW * C_in

    # Only the middle kernel row (kh=1) contributes when H == 1 with padding = 1.
    w_mid = jnp.transpose(wconv[:, :, KH // 2, :], (2, 1, 0))    # (KW, C_in, C_out)
    w_tap = w_mid.reshape(K_in, C_out)                           # row = kw*C_in + c

    # Block-diagonal conv weight: W_big[d*K_in + k, d*C_out + o] = w_tap[k, o]
    eye = jnp.eye(D, dtype=wconv.dtype)
    w_big = (eye[:, None, :, None] * w_tap[None, :, None, :]).reshape(D * K_in, D * C_out)
    b_conv = jnp.broadcast_to(bconv[None, :], (D, C_out)).reshape(1, D * C_out)

    # fc1 columns: torch flatten index o*D + d  ->  kernel index d*C_out + o.
    w1_k = jnp.transpose(w1.reshape(F2, C_out, D), (2, 1, 0)).reshape(D * C_out, F2)
    b1_k = b1.reshape(1, F2)

    # fc2: pad N up to a multiple of 128 lanes for a dense output store.
    Np = _round_up(num_out, 128)
    w2_k = jnp.zeros((F2, Np), w2.dtype).at[:, :num_out].set(w2.T)
    b2_k = jnp.zeros((1, Np), b2.dtype).at[:, :num_out].set(b2[None, :])
    return (w_big, b_conv, w1_k, b1_k, w2_k, b2_k)


# ------------------------------------------------------------------------- forward
@functools.partial(jax.jit, static_argnames=("num_out", "block_b"))
def drill_forward(x_nchw, prep, *, num_out, block_b=256):
    """x_nchw: (B, C_in, 1, D) float32, exactly like the PyTorch module."""
    w_big, b_conv, w1_k, b1_k, w2_k, b2_k = prep
    B, C_in, H, D = x_nchw.shape
    assert H == 1, "Drill consumes (B, C_in, 1, D) inputs"
    KW = w_big.shape[0] // (D * C_in)
    Din = D * KW * C_in
    F = w1_k.shape[0]
    F2 = w1_k.shape[1]
    Np = w2_k.shape[1]

    # ---- layout glue (fuses into surrounding HLO under jit; no per-call param work) ----
    x_nwc = jnp.transpose(x_nchw[:, :, 0, :], (0, 2, 1))                   # (B, D, C_in)
    pad = KW // 2
    xpad = jnp.pad(x_nwc, ((0, 0), (pad, pad), (0, 0)))                    # (B, D+2, C_in)
    cols = [xpad[:, kw:kw + D, :] for kw in range(KW)]                     # im2col taps
    x_flat = jnp.concatenate(cols, axis=-1).reshape(B, Din)                # (B, D*KW*C_in)

    # Batch tiling: TB a multiple of 8 sublanes, capped for large replay-buffer batches.
    TB = block_b if B >= block_b else _round_up(B, 8)
    Bp = _round_up(B, TB)
    if Bp != B:
        x_flat = jnp.pad(x_flat, ((0, Bp - B), (0, 0)))

    # TODO(synk): for MXU-bound large batches on v6e/v7x, cast x/weights to bf16 here
    # (keep f32 accumulation via preferred_element_type); kept f32 for exactness.
    out = pl.pallas_call(
        drill_kernel,
        out_shape=jax.ShapeDtypeStruct((Bp, Np), jnp.float32),
        grid=(Bp // TB,),
        in_specs=[
            pl.BlockSpec((TB, Din), lambda i: (i, 0)),   # activations, tiled over batch
            pl.BlockSpec((Din, F), lambda i: (0, 0)),    # weights stay resident
            pl.BlockSpec((1, F), lambda i: (0, 0)),
            pl.BlockSpec((F, F2), lambda i: (0, 0)),
            pl.BlockSpec((1, F2), lambda i: (0, 0)),
            pl.BlockSpec((F2, Np), lambda i: (0, 0)),
            pl.BlockSpec((1, Np), lambda i: (0, 0)),
        ],
        out_specs=pl.BlockSpec((TB, Np), lambda i: (i, 0)),
        compiler_params=pltpu.CompilerParams(
            dimension_semantics=("parallel",)),
    )(x_flat, w_big, b_conv, w1_k, b1_k, w2_k, b2_k)

    return out[:B, :num_out]


# ------------------------------------------------------------------------- test glue
def init_params(key, C_in=4, D=32, C_out=8, num_out=1):
    """Deterministic synthetic init matching the module's parameter shapes.
    conv1/fc1 use xavier_normal_ (as in Drill.init); biases are small normals."""
    F = C_out * D
    F2 = F // 2
    ks = jax.random.split(key, 6)

    def xavier(k, shape, fan_in, fan_out):
        std = float(np.sqrt(2.0 / (fan_in + fan_out)))
        return std * jax.random.normal(k, shape, jnp.float32)

    wconv = xavier(ks[0], (C_out, C_in, 3, 3), C_in * 9, C_out * 9)
    bconv = 0.1 * jax.random.normal(ks[1], (C_out,), jnp.float32)
    w1 = xavier(ks[2], (F2, F), F, F2)
    b1 = 0.1 * jax.random.normal(ks[3], (F2,), jnp.float32)
    w2 = xavier(ks[4], (num_out, F2), F2, num_out)
    b2 = 0.1 * jax.random.normal(ks[5], (num_out,), jnp.float32)
    return (wconv, bconv, w1, b1, w2, b2)


def reference_forward(x_nchw, params):
    """Pure-JAX replica of the PyTorch forward (for correctness check)."""
    wconv, bconv, w1, b1, w2, b2 = params
    y = jax.lax.conv_general_dilated(
        x_nchw, wconv, window_strides=(1, 1), padding=((1, 1), (1, 1)),
        dimension_numbers=('NCHW', 'OIHW', 'NCHW'))
    y = jnp.maximum(y + bconv[None, :, None, None], 0.0)
    y = y.reshape(y.shape[0], -1)
    h = jnp.maximum(y @ w1.T + b1[None, :], 0.0)
    return h @ w2.T + b2[None, :]


if __name__ == "__main__":
    # args equivalent: input_shape=(4, 32), first_out_channels=8, kernel_size=3, num_output=1
    B, C_in, D = 8, 4, 32
    C_out, num_out = 8, 1

    key = jax.random.PRNGKey(0)
    kx, kp = jax.random.split(key)
    params = init_params(kp, C_in=C_in, D=D, C_out=C_out, num_out=num_out)
    x = jax.random.normal(kx, (B, C_in, 1, D), jnp.float32)

    prep = prepare_params(params)                 # one-time parameter repack (hoisted)
    out = drill_forward(x, prep, num_out=num_out)
    out = jax.block_until_ready(out)
    assert out.shape == (B, num_out)

    ref = reference_forward(x, params)
    np.testing.assert_allclose(np.asarray(out), np.asarray(ref), rtol=1e-4, atol=1e-4)
    # TODO(synk): nn.MSELoss is a training-time attribute, not part of forward; omitted.
    print("KERNEL_OK")
</pallas_src>

<mosaic_0001>
module attributes {stable_mosaic.version = 11 : i64} {
  func.func @drill_kernel(%arg0: i32, %arg1: memref<8x384xf32, #tpu.memory_space<vmem>>, %arg2: memref<384x256xf32, #tpu.memory_space<vmem>>, %arg3: memref<1x256xf32, #tpu.memory_space<vmem>>, %arg4: memref<256x128xf32, #tpu.memory_space<vmem>>, %arg5: memref<1x128xf32, #tpu.memory_space<vmem>>, %arg6: memref<128x128xf32, #tpu.memory_space<vmem>>, %arg7: memref<1x128xf32, #tpu.memory_space<vmem>>, %arg8: memref<8x128xf32, #tpu.memory_space<vmem>>) attributes {dimension_semantics = [#tpu.dimension_semantics<parallel>], iteration_bounds = array<i64: 1>, scalar_prefetch = 0 : i64, scratch_operands = 0 : i64, tpu.core_type = #tpu.core_type<tc>, window_params = [{transform_indices = @transform_0, window_bounds = array<i64: 8, 384>}, {pipeline_mode = #tpu.pipeline_mode<synchronous>, transform_indices = @transform_1, window_bounds = array<i64: 384, 256>}, {pipeline_mode = #tpu.pipeline_mode<synchronous>, transform_indices = @transform_2, window_bounds = array<i64: 1, 256>}, {pipeline_mode = #tpu.pipeline_mode<synchronous>, transform_indices = @transform_3, window_bounds = array<i64: 256, 128>}, {pipeline_mode = #tpu.pipeline_mode<synchronous>, transform_indices = @transform_4, window_bounds = array<i64: 1, 128>}, {pipeline_mode = #tpu.pipeline_mode<synchronous>, transform_indices = @transform_5, window_bounds = array<i64: 128, 128>}, {pipeline_mode = #tpu.pipeline_mode<synchronous>, transform_indices = @transform_6, window_bounds = array<i64: 1, 128>}, {transform_indices = @transform_7, window_bounds = array<i64: 8, 128>}]} {
    %c0 = arith.constant 0 : index
    %c0_0 = arith.constant 0 : index
    %0 = vector.load %arg1[%c0, %c0_0] : memref<8x384xf32, #tpu.memory_space<vmem>>, vector<8x384xf32>
    %c0_1 = arith.constant 0 : index
    %c0_2 = arith.constant 0 : index
    %1 = vector.load %arg2[%c0_1, %c0_2] : memref<384x256xf32, #tpu.memory_space<vmem>>, vector<384x256xf32>
    %cst = arith.constant dense<0.000000e+00> : vector<8x256xf32>
    %2 = tpu.matmul %0, %1, %cst {dimension_numbers = #tpu.dot_dimension_numbers<[1], [0], [0], [1], [0, 0, 1, 1], [], []>} : vector<8x384xf32>, vector<384x256xf32>, vector<8x256xf32> -> vector<8x256xf32>
    %c0_3 = arith.constant 0 : index
    %c0_4 = arith.constant 0 : index
    %3 = vector.load %arg3[%c0_3, %c0_4] : memref<1x256xf32, #tpu.memory_space<vmem>>, vector<1x256xf32>
    %4 = vector.broadcast %3 : vector<1x256xf32> to vector<8x256xf32>
    %5 = arith.addf %2, %4 : vector<8x256xf32>
    %cst_5 = arith.constant 0.000000e+00 : f32
    %6 = vector.broadcast %cst_5 : f32 to vector<8x256xf32>
    %7 = arith.maximumf %5, %6 : vector<8x256xf32>
    %c0_6 = arith.constant 0 : index
    %c0_7 = arith.constant 0 : index
    %8 = vector.load %arg4[%c0_6, %c0_7] : memref<256x128xf32, #tpu.memory_space<vmem>>, vector<256x128xf32>
    %cst_8 = arith.constant dense<0.000000e+00> : vector<8x128xf32>
    %9 = tpu.matmul %7, %8, %cst_8 {dimension_numbers = #tpu.dot_dimension_numbers<[1], [0], [0], [1], [0, 0, 1, 1], [], []>} : vector<8x256xf32>, vector<256x128xf32>, vector<8x128xf32> -> vector<8x128xf32>
    %c0_9 = arith.constant 0 : index
    %c0_10 = arith.constant 0 : index
    %10 = vector.load %arg5[%c0_9, %c0_10] : memref<1x128xf32, #tpu.memory_space<vmem>>, vector<1x128xf32>
    %11 = vector.broadcast %10 : vector<1x128xf32> to vector<8x128xf32>
    %12 = arith.addf %9, %11 : vector<8x128xf32>
    %cst_11 = arith.constant 0.000000e+00 : f32
    %13 = vector.broadcast %cst_11 : f32 to vector<8x128xf32>
    %14 = arith.maximumf %12, %13 : vector<8x128xf32>
    %c0_12 = arith.constant 0 : index
    %c0_13 = arith.constant 0 : index
    %15 = vector.load %arg6[%c0_12, %c0_13] : memref<128x128xf32, #tpu.memory_space<vmem>>, vector<128x128xf32>
    %cst_14 = arith.constant dense<0.000000e+00> : vector<8x128xf32>
    %16 = tpu.matmul %14, %15, %cst_14 {dimension_numbers = #tpu.dot_dimension_numbers<[1], [0], [0], [1], [0, 0, 1, 1], [], []>} : vector<8x128xf32>, vector<128x128xf32>, vector<8x128xf32> -> vector<8x128xf32>
    %c0_15 = arith.constant 0 : index
    %c0_16 = arith.constant 0 : index
    %17 = vector.load %arg7[%c0_15, %c0_16] : memref<1x128xf32, #tpu.memory_space<vmem>>, vector<1x128xf32>
    %18 = vector.broadcast %17 : vector<1x128xf32> to vector<8x128xf32>
    %19 = arith.addf %16, %18 : vector<8x128xf32>
    %c0_17 = arith.constant 0 : index
    %c0_18 = arith.constant 0 : index
    %20 = vector.load %arg8[%c0_17, %c0_18] : memref<8x128xf32, #tpu.memory_space<vmem>>, vector<8x128xf32>
    tpu.vector_store %arg8[%c0_17, %c0_18], %19 {strides = array<i32>} : memref<8x128xf32, #tpu.memory_space<vmem>>, vector<8x128xf32>,
    return
  }
  func.func @transform_0(%arg0: i32) -> (i32, i32) {
    %c0_i32 = arith.constant 0 : i32
    %c0_i32_0 = arith.constant 0 : i32
    return %arg0, %c0_i32 : i32, i32
  }
  func.func @transform_1(%arg0: i32) -> (i32, i32) {
    %c0_i32 = arith.constant 0 : i32
    %c0_i32_0 = arith.constant 0 : i32
    %c0_i32_1 = arith.constant 0 : i32
    return %c0_i32, %c0_i32_0 : i32, i32
  }
  func.func @transform_2(%arg0: i32) -> (i32, i32) {
    %c0_i32 = arith.constant 0 : i32
    %c0_i32_0 = arith.constant 0 : i32
    %c0_i32_1 = arith.constant 0 : i32
    return %c0_i32, %c0_i32_0 : i32, i32
  }
  func.func @transform_3(%arg0: i32) -> (i32, i32) {
    %c0_i32 = arith.constant 0 : i32
    %c0_i32_0 = arith.constant 0 : i32
    %c0_i32_1 = arith.constant 0 : i32
    return %c0_i32, %c0_i32_0 : i32, i32
  }
  func.func @transform_4(%arg0: i32) -> (i32, i32) {
    %c0_i32 = arith.constant 0 : i32
    %c0_i32_0 = arith.constant 0 : i32
    %c0_i32_1 = arith.constant 0 : i32
    return %c0_i32, %c0_i32_0 : i32, i32
  }
  func.func @transform_5(%arg0: i32) -> (i32, i32) {
    %c0_i32 = arith.constant 0 : i32
    %c0_i32_0 = arith.constant 0 : i32
    %c0_i32_1 = arith.constant 0 : i32
    return %c0_i32, %c0_i32_0 : i32, i32
  }
  func.func @transform_6(%arg0: i32) -> (i32, i32) {
    %c0_i32 = arith.constant 0 : i32
    %c0_i32_0 = arith.constant 0 : i32
    %c0_i32_1 = arith.constant 0 : i32
    return %c0_i32, %c0_i32_0 : i32, i32
  }
  func.func @transform_7(%arg0: i32) -> (i32, i32) {
    %c0_i32 = arith.constant 0 : i32
    %c0_i32_0 = arith.constant 0 : i32
    return %arg0, %c0_i32 : i32, i32
  }
}

</mosaic_0001>

<llo_original>
// kernel: drill_forward.1
$region0: #{drill_forward.1}
  #allocation0 [shape = 'u32[]', space=smem, size = 0x4, offset = 0x4, fixed_abs, tag = 'smem constant byte address 0x4 - core index']
  #allocation1 [shape = 'u32[144,128]{1,0:T(1,128)}', space=vmem, size = 0x12000, scoped, tag = 'internal scratch']
  %s0 = inlined_call_operand.vmem [shape: f32[8,384], index: 0, kind: input, shape index: {}]
  %s1 = inlined_call_operand.vmem [shape: f32[384,256], index: 1, kind: input, shape index: {}]
  %s2 = inlined_call_operand.vmem [shape: f32[1,256], index: 2, kind: input, shape index: {}]
  %s3 = inlined_call_operand.hbm [shape: f32[256,128], index: 3, kind: input, shape index: {}]
  %s4 = inlined_call_operand.vmem [shape: f32[1,128], index: 4, kind: input, shape index: {}]
  %s5 = inlined_call_operand.vmem [shape: f32[128,128], index: 5, kind: input, shape index: {}]
  %s6 = inlined_call_operand.vmem [shape: f32[1,128], index: 6, kind: input, shape index: {}]
  %s7 = inlined_call_operand.vmem [shape: f32[8,128], index: 7, kind: output, shape index: {}]
  %s8 = sld [smem:[#allocation0]]
  $region42: #{drill_forward.1} parent=0
    _
  %s10 = ssub.s32 1, %s8
  %s11 = scalar_select 0, %s10, %s8
  $region1: #{drill_forward.1} parent=0
    #allocation2 [shape = 'u8[131072]{0}', space=vmem, size = 0x20000, scoped, tag = 'input window, operand 3, single buffered']
    #allocation3 [shape = 's32[1]{0}', space=sflag, size = 0x4, scoped, tag = 'scoped memory for drill_forward.1']
    %12 = vsyncpa [#allocation3], 0
    // Predicated region
    $region2: #{drill_forward.1} parent=1 // pred_check
      _
    $region3: #{drill_forward.1} parent=1 // pred_check_branch
      %14 = sbr.rel (0) target = $region5
    $region4: #{drill_forward.1} parent=1 // pred_region
      _
    $region5: #{drill_forward.1} parent=1 // pred_fallthru
      _
    // Predicated region
    $region6: #{drill_forward.1} parent=1 // pred_check
      _
    $region7: #{drill_forward.1} parent=1 // pred_check_branch
      %16 = sbr.rel (0) target = $region9
    $region8: #{drill_forward.1} parent=1 // pred_region
      _
    $region9: #{drill_forward.1} parent=1 // pred_fallthru
      _
    // Predicated region
    $region10: #{drill_forward.1} parent=1 // pred_check
      _
    $region11: #{drill_forward.1} parent=1 // pred_check_branch
      %18 = sbr.rel (0) target = $region13
    $region12: #{drill_forward.1} parent=1 // pred_region
      _
    $region13: #{drill_forward.1} parent=1 // pred_fallthru
      _
    // Predicated region
    $region14: #{drill_forward.1} parent=1 // pred_check
      _
    $region15: #{drill_forward.1} parent=1 // pred_check_branch
      %20 = sbr.rel (0) target = $region17
    $region16: #{drill_forward.1} parent=1 // pred_region
      %s22 = ssub.s32 4096, 4096
      %23 = vsyncadd [#allocation3], %s22
      %s24 = sshll.u32 [#allocation2], 4
      %s25 = int_to_ptr.vmem [resolvable:$true] %s24
      %30 = dma.hbm_to_vmem [thread:$0]  %s3, 4096, %s25, [#allocation3], 128, 128, 8
    $region17: #{drill_forward.1} parent=1 // pred_fallthru
      _
    // Predicated region
    $region18: #{drill_forward.1} parent=1 // pred_check
      _
    $region19: #{drill_forward.1} parent=1 // pred_check_branch
      %32 = sbr.rel (0) target = $region21
    $region20: #{drill_forward.1} parent=1 // pred_region
      _
    $region21: #{drill_forward.1} parent=1 // pred_fallthru
      _
    // Predicated region
    $region22: #{drill_forward.1} parent=1 // pred_check
      _
    $region23: #{drill_forward.1} parent=1 // pred_check_branch
      %34 = sbr.rel (0) target = $region25
    $region24: #{drill_forward.1} parent=1 // pred_region
      _
    $region25: #{drill_forward.1} parent=1 // pred_fallthru
      _
    // Predicated region
    $region26: #{drill_forward.1} parent=1 // pred_check
      _
    $region27: #{drill_forward.1} parent=1 // pred_check_branch
      %36 = sbr.rel (0) target = $region29
    $region28: #{drill_forward.1} parent=1 // pred_region
      _
    $region29: #{drill_forward.1} parent=1 // pred_fallthru
      _
    // Predicated region
    $region30: #{drill_forward.1} parent=1 // pred_check
      _
    $region31: #{drill_forward.1} parent=1 // pred_check_branch
      %38 = sbr.rel (0) target = $region33
    $region32: #{drill_forward.1} parent=1 // pred_region
      %39 = dma.done [#allocation3], 4096
    $region33: #{drill_forward.1} parent=1 // pred_fallthru
      _
    %v40 = vld [vmem:[%s0] sm:$0xff]
    %v41 = vld [vmem:[%s0 + $0x8] sm:$0xff]
    %v42 = vld [vmem:[%s0 + $0x10] sm:$0xff]
    %v43 = vld [vmem:[%s1] sm:$0xff]
    %v44 = vld [vmem:[%s1 + $0x8] sm:$0xff]
    %v45 = vld [vmem:[%s1 + $0x10] sm:$0xff]
    %v46 = vld [vmem:[%s1 + $0x18] sm:$0xff]
    %v47 = vld [vmem:[%s1 + $0x20] sm:$0xff]
    %v48 = vld [vmem:[%s1 + $0x28] sm:$0xff]
    %v49 = vld [vmem:[%s1 + $0x30] sm:$0xff]
    %v50 = vld [vmem:[%s1 + $0x38] sm:$0xff]
    %v51 = vld [vmem:[%s1 + $0x40] sm:$0xff]
    %v52 = vld [vmem:[%s1 + $0x48] sm:$0xff]
    %v53 = vld [vmem:[%s1 + $0x50] sm:$0xff]
    %v54 = vld [vmem:[%s1 + $0x58] sm:$0xff]
    %v55 = vld [vmem:[%s1 + $0x60] sm:$0xff]
    %v56 = vld [vmem:[%s1 + $0x68] sm:$0xff]
    %v57 = vld [vmem:[%s1 + $0x70] sm:$0xff]
    %v58 = vld [vmem:[%s1 + $0x78] sm:$0xff]
    %v59 = vld [vmem:[%s1 + $0x80] sm:$0xff]
    %v60 = vld [vmem:[%s1 + $0x88] sm:$0xff]
    %v61 = vld [vmem:[%s1 + $0x90] sm:$0xff]
    %v62 = vld [vmem:[%s1 + $0x98] sm:$0xff]
    %v63 = vld [vmem:[%s1 + $0xa0] sm:$0xff]
    %v64 = vld [vmem:[%s1 + $0xa8] sm:$0xff]
    %v65 = vld [vmem:[%s1 + $0xb0] sm:$0xff]
    %v66 = vld [vmem:[%s1 + $0xb8] sm:$0xff]
    %v67 = vld [vmem:[%s1 + $0xc0] sm:$0xff]
    %v68 = vld [vmem:[%s1 + $0xc8] sm:$0xff]
    %v69 = vld [vmem:[%s1 + $0xd0] sm:$0xff]
    %v70 = vld [vmem:[%s1 + $0xd8] sm:$0xff]
    %v71 = vld [vmem:[%s1 + $0xe0] sm:$0xff]
    %v72 = vld [vmem:[%s1 + $0xe8] sm:$0xff]
    %v73 = vld [vmem:[%s1 + $0xf0] sm:$0xff]
    %v74 = vld [vmem:[%s1 + $0xf8] sm:$0xff]
    %v75 = vld [vmem:[%s1 + $0x100] sm:$0xff]
    %v76 = vld [vmem:[%s1 + $0x108] sm:$0xff]
    %v77 = vld [vmem:[%s1 + $0x110] sm:$0xff]
    %v78 = vld [vmem:[%s1 + $0x118] sm:$0xff]
    %v79 = vld [vmem:[%s1 + $0x120] sm:$0xff]
    %v80 = vld [vmem:[%s1 + $0x128] sm:$0xff]
    %v81 = vld [vmem:[%s1 + $0x130] sm:$0xff]
    %v82 = vld [vmem:[%s1 + $0x138] sm:$0xff]
    %v83 = vld [vmem:[%s1 + $0x140] sm:$0xff]
    %v84 = vld [vmem:[%s1 + $0x148] sm:$0xff]
    %v85 = vld [vmem:[%s1 + $0x150] sm:$0xff]
    %v86 = vld [vmem:[%s1 + $0x158] sm:$0xff]
    %v87 = vld [vmem:[%s1 + $0x160] sm:$0xff]
    %v88 = vld [vmem:[%s1 + $0x168] sm:$0xff]
    %v89 = vld [vmem:[%s1 + $0x170] sm:$0xff]
    %v90 = vld [vmem:[%s1 + $0x178] sm:$0xff]
    %v91 = vld [vmem:[%s1 + $0x180] sm:$0xff]
    %v92 = vld [vmem:[%s1 + $0x188] sm:$0xff]
    %v93 = vld [vmem:[%s1 + $0x190] sm:$0xff]
    %v94 = vld [vmem:[%s1 + $0x198] sm:$0xff]
    %v95 = vld [vmem:[%s1 + $0x1a0] sm:$0xff]
    %v96 = vld [vmem:[%s1 + $0x1a8] sm:$0xff]
    %v97 = vld [vmem:[%s1 + $0x1b0] sm:$0xff]
    %v98 = vld [vmem:[%s1 + $0x1b8] sm:$0xff]
    %v99 = vld [vmem:[%s1 + $0x1c0] sm:$0xff]
    %v100 = vld [vmem:[%s1 + $0x1c8] sm:$0xff]
    %v101 = vld [vmem:[%s1 + $0x1d0] sm:$0xff]
    %v102 = vld [vmem:[%s1 + $0x1d8] sm:$0xff]
    %v103 = vld [vmem:[%s1 + $0x1e0] sm:$0xff]
    %v104 = vld [vmem:[%s1 + $0x1e8] sm:$0xff]
    %v105 = vld [vmem:[%s1 + $0x1f0] sm:$0xff]
    %v106 = vld [vmem:[%s1 + $0x1f8] sm:$0xff]
    %v107 = vld [vmem:[%s1 + $0x200] sm:$0xff]
    %v108 = vld [vmem:[%s1 + $0x208] sm:$0xff]
    %v109 = vld [vmem:[%s1 + $0x210] sm:$0xff]
    %v110 = vld [vmem:[%s1 + $0x218] sm:$0xff]
    %v111 = vld [vmem:[%s1 + $0x220] sm:$0xff]
    %v112 = vld [vmem:[%s1 + $0x228] sm:$0xff]
    %v113 = vld [vmem:[%s1 + $0x230] sm:$0xff]
    %v114 = vld [vmem:[%s1 + $0x238] sm:$0xff]
    %v115 = vld [vmem:[%s1 + $0x240] sm:$0xff]
    %v116 = vld [vmem:[%s1 + $0x248] sm:$0xff]
    %v117 = vld [vmem:[%s1 + $0x250] sm:$0xff]
    %v118 = vld [vmem:[%s1 + $0x258] sm:$0xff]
    %v119 = vld [vmem:[%s1 + $0x260] sm:$0xff]
    %v120 = vld [vmem:[%s1 + $0x268] sm:$0xff]
    %v121 = vld [vmem:[%s1 + $0x270] sm:$0xff]
    %v122 = vld [vmem:[%s1 + $0x278] sm:$0xff]
    %v123 = vld [vmem:[%s1 + $0x280] sm:$0xff]
    %v124 = vld [vmem:[%s1 + $0x288] sm:$0xff]
    %v125 = vld [vmem:[%s1 + $0x290] sm:$0xff]
    %v126 = vld [vmem:[%s1 + $0x298] sm:$0xff]
    %v127 = vld [vmem:[%s1 + $0x2a0] sm:$0xff]
    %v128 = vld [vmem:[%s1 + $0x2a8] sm:$0xff]
    %v129 = vld [vmem:[%s1 + $0x2b0] sm:$0xff]
    %v130 = vld [vmem:[%s1 + $0x2b8] sm:$0xff]
    %v131 = vld [vmem:[%s1 + $0x2c0] sm:$0xff]
    %v132 = vld [vmem:[%s1 + $0x2c8] sm:$0xff]
    %v133 = vld [vmem:[%s1 + $0x2d0] sm:$0xff]
    %v134 = vld [vmem:[%s1 + $0x2d8] sm:$0xff]
    %v135 = vld [vmem:[%s1 + $0x2e0] sm:$0xff]
    %v136 = vld [vmem:[%s1 + $0x2e8] sm:$0xff]
    %v137 = vld [vmem:[%s1 + $0x2f0] sm:$0xff]
    %v138 = vld [vmem:[%s1 + $0x2f8] sm:$0xff]
    %v139 = vld [vmem:[%s2] sm:$0x3]
    %v141 = vlaneseq
    %v142 = vshrl.u32 %v141, 7
    %v143 = vsub.s32 0, %v142
    %v144 = vrot.slane %v139, %v143
    %v145 = vlaneseq
    %v146 = vshrl.u32 %v145, 7
    %v147 = vsub.s32 1, %v146
    %v148 = vrot.slane %v139, %v147
    %151 = vmatprep.subr.mxu0 %v74
    %152 = vmatpush1.msra.mxu0 %v73
    %153 = vmatprep.subr.mxu0 %v72
    %154 = vmatpush1.msra.mxu0 %v71
    %155 = vmatprep.subr.mxu0 %v70
    %156 = vmatpush1.msra.mxu0 %v69
    %157 = vmatprep.subr.mxu0 %v68
    %158 = vmatpush1.msra.mxu0 %v67
    %159 = vmatprep.subr.mxu0 %v66
    %160 = vmatpush1.msra.mxu0 %v65
    %161 = vmatprep.subr.mxu0 %v64
    %162 = vmatpush1.msra.mxu0 %v63
    %163 = vmatprep.subr.mxu0 %v62
    %164 = vmatpush1.msra.mxu0 %v61
    %165 = vmatprep.subr.mxu0 %v60
    %166 = vmatpush1.msra.mxu0 %v59
    %167 = vmatprep.subr.mxu0 %v58
    %168 = vmatpush1.msra.mxu0 %v57
    %169 = vmatprep.subr.mxu0 %v56
    %170 = vmatpush1.msra.mxu0 %v55
    %171 = vmatprep.subr.mxu0 %v54
    %172 = vmatpush1.msra.mxu0 %v53
    %173 = vmatprep.subr.mxu0 %v52
    %174 = vmatpush1.msra.mxu0 %v51
    %175 = vmatprep.subr.mxu0 %v50
    %176 = vmatpush1.msra.mxu0 %v49
    %177 = vmatprep.subr.mxu0 %v48
    %178 = vmatpush1.msra.mxu0 %v47
    %179 = vmatprep.subr.mxu0 %v46
    %180 = vmatpush1.msra.mxu0 %v45
    %181 = vmatprep.subr.mxu0 %v44
    %182 = vmatpush1.msra.mxu0 %v43
    %183 = vmatprep.subr.mxu0 %v106
    %184 = vmatpush2.msra.mxu0 %v105
    %185 = vmatprep.subr.mxu0 %v104
    %186 = vmatpush2.msra.mxu0 %v103
    %187 = vmatprep.subr.mxu0 %v102
    %188 = vmatpush2.msra.mxu0 %v101
    %189 = vmatprep.subr.mxu0 %v100
    %190 = vmatpush2.msra.mxu0 %v99
    %191 = vmatprep.subr.mxu0 %v98
    %192 = vmatpush2.msra.mxu0 %v97
    %193 = vmatprep.subr.mxu0 %v96
    %194 = vmatpush2.msra.mxu0 %v95
    %195 = vmatprep.subr.mxu0 %v94
    %196 = vmatpush2.msra.mxu0 %v93
    %197 = vmatprep.subr.mxu0 %v92
    %198 = vmatpush2.msra.mxu0 %v91
    %199 = vmatprep.subr.mxu0 %v90
    %200 = vmatpush2.msra.mxu0 %v89
    %201 = vmatprep.subr.mxu0 %v88
    %202 = vmatpush2.msra.mxu0 %v87
    %203 = vmatprep.subr.mxu0 %v86
    %204 = vmatpush2.msra.mxu0 %v85
    %205 = vmatprep.subr.mxu0 %v84
    %206 = vmatpush2.msra.mxu0 %v83
    %207 = vmatprep.subr.mxu0 %v82
    %208 = vmatpush2.msra.mxu0 %v81
    %209 = vmatprep.subr.mxu0 %v80
    %210 = vmatpush2.msra.mxu0 %v79
    %211 = vmatprep.subr.mxu0 %v78
    %212 = vmatpush2.msra.mxu0 %v77
    %213 = vmatprep.subr.mxu0 %v76
    %214 = vmatpush2.msra.mxu0 %v75
    %215 = vmatprep.mubr.f32.mxu0 %v41
    %216 = vmatmul.mubr.f32.gmra.mxu0 %v40
    %v217 = vpop.f32.mrf.mxu0
    %v218 = vadd.f32 %v144, %v217
    %v219 = vpop.f32.mrf.mxu0
    %v220 = vadd.f32 %v148, %v219
    %221 = vdwg.mxu0
    %222 = vmatprep.subr.mxu0 %v138
    %223 = vmatpush1.msra.mxu0 %v137
    %224 = vmatprep.subr.mxu0 %v136
    %225 = vmatpush1.msra.mxu0 %v135
    %226 = vmatprep.subr.mxu0 %v134
    %227 = vmatpush1.msra.mxu0 %v133
    %228 = vmatprep.subr.mxu0 %v132
    %229 = vmatpush1.msra.mxu0 %v131
    %230 = vmatprep.subr.mxu0 %v130
    %231 = vmatpush1.msra.mxu0 %v129
    %232 = vmatprep.subr.mxu0 %v128
    %233 = vmatpush1.msra.mxu0 %v127
    %234 = vmatprep.subr.mxu0 %v126
    %235 = vmatpush1.msra.mxu0 %v125
    %236 = vmatprep.subr.mxu0 %v124
    %237 = vmatpush1.msra.mxu0 %v123
    %238 = vmatprep.subr.mxu0 %v122
    %239 = vmatpush1.msra.mxu0 %v121
    %240 = vmatprep.subr.mxu0 %v120
    %241 = vmatpush1.msra.mxu0 %v119
    %242 = vmatprep.subr.mxu0 %v118
    %243 = vmatpush1.msra.mxu0 %v117
    %244 = vmatprep.subr.mxu0 %v116
    %245 = vmatpush1.msra.mxu0 %v115
    %246 = vmatprep.subr.mxu0 %v114
    %247 = vmatpush1.msra.mxu0 %v113
    %248 = vmatprep.subr.mxu0 %v112
    %249 = vmatpush1.msra.mxu0 %v111
    %250 = vmatprep.subr.mxu0 %v110
    %251 = vmatpush1.msra.mxu0 %v109
    %252 = vmatprep.subr.mxu0 %v108
    %253 = vmatpush1.msra.mxu0 %v107
    %254 = vmatprep.subr.mxu0 0.0
    %255 = vmatpush2.msra.mxu0 0.0
    %256 = vmatprep.subr.mxu0 0.0
    %257 = vmatpush2.msra.mxu0 0.0
    %258 = vmatprep.subr.mxu0 0.0
    %259 = vmatpush2.msra.mxu0 0.0
    %260 = vmatprep.subr.mxu0 0.0
    %261 = vmatpush2.msra.mxu0 0.0
    %262 = vmatprep.subr.mxu0 0.0
    %263 = vmatpush2.msra.mxu0 0.0
    %264 = vmatprep.subr.mxu0 0.0
    %265 = vmatpush2.msra.mxu0 0.0
    %266 = vmatprep.subr.mxu0 0.0
    %267 = vmatpush2.msra.mxu0 0.0
    %268 = vmatprep.subr.mxu0 0.0
    %269 = vmatpush2.msra.mxu0 0.0
    %270 = vmatprep.subr.mxu0 0.0
    %271 = vmatpush2.msra.mxu0 0.0
    %272 = vmatprep.subr.mxu0 0.0
    %273 = vmatpush2.msra.mxu0 0.0
    %274 = vmatprep.subr.mxu0 0.0
    %275 = vmatpush2.msra.mxu0 0.0
    %276 = vmatprep.subr.mxu0 0.0
    %277 = vmatpush2.msra.mxu0 0.0
    %278 = vmatprep.subr.mxu0 0.0
    %279 = vmatpush2.msra.mxu0 0.0
    %280 = vmatprep.subr.mxu0 0.0
    %281 = vmatpush2.msra.mxu0 0.0
    %282 = vmatprep.subr.mxu0 0.0
    %283 = vmatpush2.msra.mxu0 0.0
    %284 = vmatprep.subr.mxu0 0.0
    %285 = vmatpush2.msra.mxu0 0.0
    %286 = vmatprep.mubr.f32.mxu0 0.0
    %287 = vmatmul.mubr.f32.gmra.mxu0 %v42
    %v288 = vpop.f32.mrf.mxu0
    %v289 = vadd.f32 %v218, %v288
    %v290 = vpop.f32.mrf.mxu0
    %v291 = vadd.f32 %v220, %v290
    %292 = vdwg.mxu0
    %v293 = vmax.f32 %v289, 0.0
    %v294 = vmax.f32 %v291, 0.0
    %v295 = vld [vmem:[#allocation2] sm:$0xff]
    %v296 = vld [vmem:[#allocation2 + $0x8] sm:$0xff]
    %v297 = vld [vmem:[#allocation2 + $0x10] sm:$0xff]
    %v298 = vld [vmem:[#allocation2 + $0x18] sm:$0xff]
    %v299 = vld [vmem:[#allocation2 + $0x20] sm:$0xff]
    %v300 = vld [vmem:[#allocation2 + $0x28] sm:$0xff]
    %v301 = vld [vmem:[#allocation2 + $0x30] sm:$0xff]
    %v302 = vld [vmem:[#allocation2 + $0x38] sm:$0xff]
    %v303 = vld [vmem:[#allocation2 + $0x40] sm:$0xff]
    %v304 = vld [vmem:[#allocation2 + $0x48] sm:$0xff]
    %v305 = vld [vmem:[#allocation2 + $0x50] sm:$0xff]
    %v306 = vld [vmem:[#allocation2 + $0x58] sm:$0xff]
    %v307 = vld [vmem:[#allocation2 + $0x60] sm:$0xff]
    %v308 = vld [vmem:[#allocation2 + $0x68] sm:$0xff]
    %v309 = vld [vmem:[#allocation2 + $0x70] sm:$0xff]
    %v310 = vld [vmem:[#allocation2 + $0x78] sm:$0xff]
    %v311 = vld [vmem:[#allocation2 + $0x80] sm:$0xff]
    %v312 = vld [vmem:[#allocation2 + $0x88] sm:$0xff]
    %v313 = vld [vmem:[#allocation2 + $0x90] sm:$0xff]
    %v314 = vld [vmem:[#allocation2 + $0x98] sm:$0xff]
    %v315 = vld [vmem:[#allocation2 + $0xa0] sm:$0xff]
    %v316 = vld [vmem:[#allocation2 + $0xa8] sm:$0xff]
    %v317 = vld [vmem:[#allocation2 + $0xb0] sm:$0xff]
    %v318 = vld [vmem:[#allocation2 + $0xb8] sm:$0xff]
    %v319 = vld [vmem:[#allocation2 + $0xc0] sm:$0xff]
    %v320 = vld [vmem:[#allocation2 + $0xc8] sm:$0xff]
    %v321 = vld [vmem:[#allocation2 + $0xd0] sm:$0xff]
    %v322 = vld [vmem:[#allocation2 + $0xd8] sm:$0xff]
    %v323 = vld [vmem:[#allocation2 + $0xe0] sm:$0xff]
    %v324 = vld [vmem:[#allocation2 + $0xe8] sm:$0xff]
    %v325 = vld [vmem:[#allocation2 + $0xf0] sm:$0xff]
    %v326 = vld [vmem:[#allocation2 + $0xf8] sm:$0xff]
    %v327 = vld [vmem:[%s4] sm:$0x1]
    %v329 = vlaneseq
    %v330 = vshrl.u32 %v329, 7
    %v331 = vsub.s32 0, %v330
    %v332 = vrot.slane %v327, %v331
    %334 = vmatprep.subr.mxu0 0.0
    %335 = vmatpush1.msra.mxu0 %v310
    %336 = vmatprep.subr.mxu0 0.0
    %337 = vmatpush1.msra.mxu0 %v309
    %338 = vmatprep.subr.mxu0 0.0
    %339 = vmatpush1.msra.mxu0 %v308
    %340 = vmatprep.subr.mxu0 0.0
    %341 = vmatpush1.msra.mxu0 %v307
    %342 = vmatprep.subr.mxu0 0.0
    %343 = vmatpush1.msra.mxu0 %v306
    %344 = vmatprep.subr.mxu0 0.0
    %345 = vmatpush1.msra.mxu0 %v305
    %346 = vmatprep.subr.mxu0 0.0
    %347 = vmatpush1.msra.mxu0 %v304
    %348 = vmatprep.subr.mxu0 0.0
    %349 = vmatpush1.msra.mxu0 %v303
    %350 = vmatprep.subr.mxu0 0.0
    %351 = vmatpush1.msra.mxu0 %v302
    %352 = vmatprep.subr.mxu0 0.0
    %353 = vmatpush1.msra.mxu0 %v301
    %354 = vmatprep.subr.mxu0 0.0
    %355 = vmatpush1.msra.mxu0 %v300
    %356 = vmatprep.subr.mxu0 0.0
    %357 = vmatpush1.msra.mxu0 %v299
    %358 = vmatprep.subr.mxu0 0.0
    %359 = vmatpush1.msra.mxu0 %v298
    %360 = vmatprep.subr.mxu0 0.0
    %361 = vmatpush1.msra.mxu0 %v297
    %362 = vmatprep.subr.mxu0 0.0
    %363 = vmatpush1.msra.mxu0 %v296
    %364 = vmatprep.subr.mxu0 0.0
    %365 = vmatpush1.msra.mxu0 %v295
    %366 = vmatprep.subr.mxu0 0.0
    %367 = vmatpush2.msra.mxu0 %v326
    %368 = vmatprep.subr.mxu0 0.0
    %369 = vmatpush2.msra.mxu0 %v325
    %370 = vmatprep.subr.mxu0 0.0
    %371 = vmatpush2.msra.mxu0 %v324
    %372 = vmatprep.subr.mxu0 0.0
    %373 = vmatpush2.msra.mxu0 %v323
    %374 = vmatprep.subr.mxu0 0.0
    %375 = vmatpush2.msra.mxu0 %v322
    %376 = vmatprep.subr.mxu0 0.0
    %377 = vmatpush2.msra.mxu0 %v321
    %378 = vmatprep.subr.mxu0 0.0
    %379 = vmatpush2.msra.mxu0 %v320
    %380 = vmatprep.subr.mxu0 0.0
    %381 = vmatpush2.msra.mxu0 %v319
    %382 = vmatprep.subr.mxu0 0.0
    %383 = vmatpush2.msra.mxu0 %v318
    %384 = vmatprep.subr.mxu0 0.0
    %385 = vmatpush2.msra.mxu0 %v317
    %386 = vmatprep.subr.mxu0 0.0
    %387 = vmatpush2.msra.mxu0 %v316
    %388 = vmatprep.subr.mxu0 0.0
    %389 = vmatpush2.msra.mxu0 %v315
    %390 = vmatprep.subr.mxu0 0.0
    %391 = vmatpush2.msra.mxu0 %v314
    %392 = vmatprep.subr.mxu0 0.0
    %393 = vmatpush2.msra.mxu0 %v313
    %394 = vmatprep.subr.mxu0 0.0
    %395 = vmatpush2.msra.mxu0 %v312
    %396 = vmatprep.subr.mxu0 0.0
    %397 = vmatpush2.msra.mxu0 %v311
    %398 = vmatprep.mubr.f32.mxu0 %v294
    %399 = vmatmul.mubr.f32.gmra.mxu0 %v293
    %v400 = vpop.f32.mrf.mxu0
    %v401 = vadd.f32 %v332, %v400
    %v402 = vpop.f32.mrf.mxu0
    %403 = vdwg.mxu0
    %v404 = vmax.f32 %v401, 0.0
    %v405 = vld [vmem:[%s5] sm:$0xff]
    %v406 = vld [vmem:[%s5 + $0x8] sm:$0xff]
    %v407 = vld [vmem:[%s5 + $0x10] sm:$0xff]
    %v408 = vld [vmem:[%s5 + $0x18] sm:$0xff]
    %v409 = vld [vmem:[%s5 + $0x20] sm:$0xff]
    %v410 = vld [vmem:[%s5 + $0x28] sm:$0xff]
    %v411 = vld [vmem:[%s5 + $0x30] sm:$0xff]
    %v412 = vld [vmem:[%s5 + $0x38] sm:$0xff]
    %v413 = vld [vmem:[%s5 + $0x40] sm:$0xff]
    %v414 = vld [vmem:[%s5 + $0x48] sm:$0xff]
    %v415 = vld [vmem:[%s5 + $0x50] sm:$0xff]
    %v416 = vld [vmem:[%s5 + $0x58] sm:$0xff]
    %v417 = vld [vmem:[%s5 + $0x60] sm:$0xff]
    %v418 = vld [vmem:[%s5 + $0x68] sm:$0xff]
    %v419 = vld [vmem:[%s5 + $0x70] sm:$0xff]
    %v420 = vld [vmem:[%s5 + $0x78] sm:$0xff]
    %v421 = vld [vmem:[%s6] sm:$0x1]
    %v423 = vlaneseq
    %v424 = vshrl.u32 %v423, 7
    %v425 = vsub.s32 0, %v424
    %v426 = vrot.slane %v421, %v425
    %428 = vmatprep.subr.mxu0 0.0
    %429 = vmatpush1.msra.mxu0 %v420
    %430 = vmatprep.subr.mxu0 0.0
    %431 = vmatpush1.msra.mxu0 %v419
    %432 = vmatprep.subr.mxu0 0.0
    %433 = vmatpush1.msra.mxu0 %v418
    %434 = vmatprep.subr.mxu0 0.0
    %435 = vmatpush1.msra.mxu0 %v417
    %436 = vmatprep.subr.mxu0 0.0
    %437 = vmatpush1.msra.mxu0 %v416
    %438 = vmatprep.subr.mxu0 0.0
    %439 = vmatpush1.msra.mxu0 %v415
    %440 = vmatprep.subr.mxu0 0.0
    %441 = vmatpush1.msra.mxu0 %v414
    %442 = vmatprep.subr.mxu0 0.0
    %443 = vmatpush1.msra.mxu0 %v413
    %444 = vmatprep.subr.mxu0 0.0
    %445 = vmatpush1.msra.mxu0 %v412
    %446 = vmatprep.subr.mxu0 0.0
    %447 = vmatpush1.msra.mxu0 %v411
    %448 = vmatprep.subr.mxu0 0.0
    %449 = vmatpush1.msra.mxu0 %v410
    %450 = vmatprep.subr.mxu0 0.0
    %451 = vmatpush1.msra.mxu0 %v409
    %452 = vmatprep.subr.mxu0 0.0
    %453 = vmatpush1.msra.mxu0 %v408
    %454 = vmatprep.subr.mxu0 0.0
    %455 = vmatpush1.msra.mxu0 %v407
    %456 = vmatprep.subr.mxu0 0.0
    %457 = vmatpush1.msra.mxu0 %v406
    %458 = vmatprep.subr.mxu0 0.0
    %459 = vmatpush1.msra.mxu0 %v405
    %460 = vmatprep.subr.mxu0 0.0
    %461 = vmatpush2.msra.mxu0 0.0
    %462 = vmatprep.subr.mxu0 0.0
    %463 = vmatpush2.msra.mxu0 0.0
    %464 = vmatprep.subr.mxu0 0.0
    %465 = vmatpush2.msra.mxu0 0.0
    %466 = vmatprep.subr.mxu0 0.0
    %467 = vmatpush2.msra.mxu0 0.0
    %468 = vmatprep.subr.mxu0 0.0
    %469 = vmatpush2.msra.mxu0 0.0
    %470 = vmatprep.subr.mxu0 0.0
    %471 = vmatpush2.msra.mxu0 0.0
    %472 = vmatprep.subr.mxu0 0.0
    %473 = vmatpush2.msra.mxu0 0.0
    %474 = vmatprep.subr.mxu0 0.0
    %475 = vmatpush2.msra.mxu0 0.0
    %476 = vmatprep.subr.mxu0 0.0
    %477 = vmatpush2.msra.mxu0 0.0
    %478 = vmatprep.subr.mxu0 0.0
    %479 = vmatpush2.msra.mxu0 0.0
    %480 = vmatprep.subr.mxu0 0.0
    %481 = vmatpush2.msra.mxu0 0.0
    %482 = vmatprep.subr.mxu0 0.0
    %483 = vmatpush2.msra.mxu0 0.0
    %484 = vmatprep.subr.mxu0 0.0
    %485 = vmatpush2.msra.mxu0 0.0
    %486 = vmatprep.subr.mxu0 0.0
    %487 = vmatpush2.msra.mxu0 0.0
    %488 = vmatprep.subr.mxu0 0.0
    %489 = vmatpush2.msra.mxu0 0.0
    %490 = vmatprep.subr.mxu0 0.0
    %491 = vmatpush2.msra.mxu0 0.0
    %492 = vmatprep.mubr.f32.mxu0 0.0
    %493 = vmatmul.mubr.f32.gmra.mxu0 %v404
    %v494 = vpop.f32.mrf.mxu0
    %v495 = vadd.f32 %v426, %v494
    %v496 = vpop.f32.mrf.mxu0
    %497 = vdwg.mxu0
    %498 = vst [vmem:[%s7] sm:$0xff] %v495
    // Predicated region
    $region34: #{drill_forward.1} parent=1 // pred_check
      _
    $region35: #{drill_forward.1} parent=1 // pred_check_branch
      %500 = sbr.rel (0) target = $region37
    $region36: #{drill_forward.1} parent=1 // pred_region
      _
    $region37: #{drill_forward.1} parent=1 // pred_fallthru
      _
    // Predicated region
    $region38: #{drill_forward.1} parent=1 // pred_check
      _
    $region39: #{drill_forward.1} parent=1 // pred_check_branch
      %502 = sbr.rel (0) target = $region41
    $region40: #{drill_forward.1} parent=1 // pred_region
      _
    $region41: #{drill_forward.1} parent=1 // pred_fallthru
      _
    %503 = vsyncpa [#allocation3], 1

</llo_original>
